<compile_context>
chip_gen: v6e
topology: v6e:2x2x1
jax: 0.10.0
libtpu: 0.0.40
codegen_flags: <defaults>
</compile_context>

<pallas_src>
import jax
import jax.numpy as jnp
import numpy as np
from jax.experimental import pallas as pl
from jax.experimental.pallas import tpu as pltpu


# ------------------- fused conv3x3 (+1x1 skip) + BN + act ------------------- #

def _conv3x3_bn_act(x_phases, w_merged, bias, *, batch, num_phases, ho, wo,
                    tap_map, act='relu', skip_kind=None, skip_x=None,
                    out_dtype=jnp.bfloat16):
    """y = act( [taps(x) | xs] @ w_merged + bias  [+ xs] ) as one Pallas kernel.

    x_phases : (batch*num_phases, Hs, Ws, Cin) polyphase-padded activation.
    w_merged : (K, Cout) with K = 9*Cin (+ Cs when skip_kind == 'cat');
               BatchNorm scale(s) already folded into the columns.
    bias     : (Cout,) f32 folded BatchNorm shift (sum of shifts if merged).
    tap_map(kh, kw) -> (phase, oh, ow): static ints; tap window is
               x_phases[n*num_phases + phase, oh:oh+ho, ow:ow+wo, :].
    skip_kind: None | 'cat' (skip_x appended as extra K columns, its 1x1 conv
               weights already inside w_merged) | 'add' (skip_x added to the
               result before the activation).
    Returns (batch, ho*wo, Cout) in out_dtype.
    """
    np_, hs, ws, cin = x_phases.shape
    assert np_ == batch * num_phases
    k_total, cout = w_merged.shape
    m = ho * wo
    k_taps = 9 * cin
    assert k_total == k_taps + (0 if skip_kind != 'cat' else skip_x.shape[-1])

    def kernel(*refs):
        if skip_kind is None:
            x_ref, w_ref, b_ref, o_ref = refs
            xs_ref = None
        else:
            x_ref, w_ref, b_ref, xs_ref, o_ref = refs

        # One f32 cast per phase (layout-safe slicing on unpacked values);
        # every tap is a *static* contiguous window of one phase.
        xph = [x_ref[ph].astype(jnp.float32) for ph in range(num_phases)]
        wins = []
        for kh in range(3):
            for kw in range(3):
                phase, oh, ow = tap_map(kh, kw)              # static ints
                wins.append(xph[phase][oh:oh + ho, ow:ow + wo, :])
        # (ho, wo, 9*Cin) -> (m, 9*Cin): leading-dim collapse only.
        lhs = jnp.concatenate(wins, axis=-1).reshape(m, k_taps)
        if skip_kind == 'cat':
            # Downsample 1x1 conv fused as extra K columns of the same matmul.
            lhs = jnp.concatenate([lhs, xs_ref[0].astype(jnp.float32)], axis=-1)

        # Single MXU matmul, bf16 operands, f32 accumulation.
        y = jnp.dot(lhs.astype(jnp.bfloat16), w_ref[...],
                    preferred_element_type=jnp.float32) + b_ref[...]
        if skip_kind == 'add':
            y = y + xs_ref[0].astype(jnp.float32)
        if act == 'relu':
            y = jnp.maximum(y, 0.0)
        elif act == 'hardtanh':
            y = jnp.clip(y, -1.0, 1.0)
        elif act == 'sigmoid':
            y = jax.nn.sigmoid(y)
        o_ref[0] = y.astype(o_ref.dtype)

    in_specs = [
        pl.BlockSpec((num_phases, hs, ws, cin), lambda n: (n, 0, 0, 0)),
        pl.BlockSpec((k_total, cout), lambda n: (0, 0)),     # resident weights
        pl.BlockSpec((1, cout), lambda n: (0, 0)),           # folded BN shift
    ]
    args = [x_phases.astype(jnp.bfloat16), w_merged.astype(jnp.bfloat16),
            bias.reshape(1, cout).astype(jnp.float32)]
    if skip_kind is not None:
        cs = skip_x.shape[-1]
        in_specs.append(pl.BlockSpec((1, m, cs), lambda n: (n, 0, 0)))
        args.append(skip_x.astype(jnp.bfloat16))

    flops = 2 * batch * m * k_total * cout
    bytes_accessed = (2 * int(x_phases.size) + 2 * int(w_merged.size)
                      + 4 * cout
                      + batch * m * cout * jnp.dtype(out_dtype).itemsize)
    if skip_kind is not None:
        bytes_accessed += 2 * int(skip_x.size)

    return pl.pallas_call(
        kernel,
        out_shape=jax.ShapeDtypeStruct((batch, m, cout), out_dtype),
        grid_spec=pltpu.PrefetchScalarGridSpec(
            num_scalar_prefetch=0,
            grid=(batch,),          # >=2 parallel steps -> shards over v7x TCs
            in_specs=in_specs,
            out_specs=pl.BlockSpec((1, m, cout), lambda n: (n, 0, 0)),
        ),
        compiler_params=pltpu.CompilerParams(
            dimension_semantics=("parallel",),
            # Blocks are double-buffered; 32 MiB stays within v7x's budget.
            vmem_limit_bytes=32 * 1024 * 1024,
        ),
        cost_estimate=pl.CostEstimate(flops=int(flops), transcendentals=0,
                                      bytes_accessed=int(bytes_accessed)),
    )(*args)


# ------------------------------- glue / prep ------------------------------- #

def _polyphase_pad(x_nhwc, stride):
    """Zero-pad by 1 and split into stride**2 polyphase images for a 3x3 conv.

    Returns (phases (N*P, Hs, Ws, C), P, Hs, Ws, Ho, Wo, tap_map) where every
    3x3 tap of the strided conv is a *contiguous* (oh:oh+Ho, ow:ow+Wo) window
    of phase p, with tap_map(kh, kw) -> (p, oh, ow)  (all static ints).
    Done in bf16 so this relayout pass costs half the HBM bytes of f32.
    """
    n, h, w, c = x_nhwc.shape
    ho = (h - 1) // stride + 1
    wo = (w - 1) // stride + 1
    xp = jnp.pad(x_nhwc, ((0, 0), (1, 1), (1, 1), (0, 0)))
    if stride == 1:
        def tap_map(kh, kw):
            return 0, kh, kw
        return xp, 1, h + 2, w + 2, ho, wo, tap_map

    assert stride == 2
    hs, ws = ho + 1, wo + 1
    phases = []
    for a in range(2):
        for b in range(2):
            ph = xp[:, a::2, b::2, :][:, :hs, :ws, :]
            ph = jnp.pad(ph, ((0, 0), (0, hs - ph.shape[1]),
                              (0, ws - ph.shape[2]), (0, 0)))
            phases.append(ph)
    phases = jnp.stack(phases, axis=1).reshape(n * 4, hs, ws, c)

    def tap_map(kh, kw):
        return (kh % 2) * 2 + (kw % 2), kh // 2, kw // 2
    return phases, 4, hs, ws, ho, wo, tap_map


def _fold_bn(gamma, beta, mean, var, eps=1e-5):
    scale = gamma * jax.lax.rsqrt(var + eps)
    return scale, beta - mean * scale


def resnet_block_forward(x_nchw, p, stride, act='relu', downsample='conv'):
    n, c, h, w = x_nchw.shape
    c_out = p['w1'].shape[0]
    # All layout glue in bf16 (halves HBM bytes of transpose/pad/slice passes).
    x = jnp.transpose(x_nchw.astype(jnp.bfloat16), (0, 2, 3, 1))     # NHWC bf16

    # op_1: 3x3 conv (stride) + BN1 + act.  BN scale folded into the weights.
    s1, b1 = _fold_bn(p['bn1_g'], p['bn1_b'], p['bn1_m'], p['bn1_v'])
    w1 = jnp.transpose(p['w1'], (2, 3, 1, 0)).reshape(9 * c, c_out) * s1[None, :]
    ph1, p1, _, _, ho, wo, tm1 = _polyphase_pad(x, stride)
    inner = _conv3x3_bn_act(ph1, w1, b1, batch=n, num_phases=p1,
                            ho=ho, wo=wo, tap_map=tm1, act=act,
                            skip_kind=None, skip_x=None,
                            out_dtype=jnp.bfloat16)          # (n, ho*wo, c_out)

    # op_2 weights: BN2 scale folded in.  Skip path fused into op_2's kernel.
    s2, b2 = _fold_bn(p['bn2_g'], p['bn2_b'], p['bn2_m'], p['bn2_v'])
    w2 = jnp.transpose(p['w2'], (2, 3, 1, 0)).reshape(9 * c_out, c_out) * s2[None, :]
    if stride == 1:
        assert c == c_out
        skip_kind, skip_x = 'add', x.reshape(n, h * w, c)     # identity residual
        w_merged, bias = w2, b2
    elif downsample == 'conv':
        # 1x1 strided conv + BN_d merged as extra K columns of op_2's matmul.
        xs = x[:, ::stride, ::stride, :].reshape(n, ho * wo, c)
        sd, bd = _fold_bn(p['bnd_g'], p['bnd_b'], p['bnd_m'], p['bnd_v'])
        wd = p['wd'][:, :, 0, 0].T * sd[None, :]              # (c, c_out)
        w_merged = jnp.concatenate([w2, wd], axis=0)          # (9*c_out + c, c_out)
        bias = b2 + bd
        skip_kind, skip_x = 'cat', xs
    else:  # 'avgpool': AvgPool2d(kernel_size=1, stride) then concat with zeros
        assert c_out == 2 * c
        xs = x[:, ::stride, ::stride, :]
        xs = jnp.concatenate([xs, jnp.zeros_like(xs)], axis=-1)
        skip_kind, skip_x = 'add', xs.reshape(n, ho * wo, c_out)
        w_merged, bias = w2, b2

    # op_2: 3x3 conv (stride 1) + BN2 + fused skip + activation, one kernel,
    # bf16 writeback (halves the output HBM traffic).
    inner_img = inner.reshape(n, ho, wo, c_out)
    ph2, p2, _, _, ho2, wo2, tm2 = _polyphase_pad(inner_img, 1)
    out = _conv3x3_bn_act(ph2, w_merged, bias, batch=n, num_phases=p2,
                          ho=ho2, wo=wo2, tap_map=tm2, act=act,
                          skip_kind=skip_kind, skip_x=skip_x,
                          out_dtype=jnp.bfloat16)             # (n, ho*wo, c_out)

    out = out.reshape(n, ho, wo, c_out)
    return jnp.transpose(out, (0, 3, 1, 2)).astype(jnp.float32)      # NCHW f32


# -------------------------------- reference -------------------------------- #

def reference_forward(x, p, stride, act='relu', downsample='conv', eps=1e-5):
    hp = jax.lax.Precision.HIGHEST

    def conv(z, w, s, pad):
        return jax.lax.conv_general_dilated(
            z, w, (s, s), pad, dimension_numbers=('NCHW', 'OIHW', 'NCHW'),
            precision=hp)

    def bn(z, g, b, m, v):
        sc = g * jax.lax.rsqrt(v + eps)
        return z * sc[None, :, None, None] + (b - m * sc)[None, :, None, None]

    def activation(z):
        if act == 'relu':
            return jax.nn.relu(z)
        if act == 'hardtanh':
            return jnp.clip(z, -1.0, 1.0)
        return jax.nn.sigmoid(z)

    inner = activation(bn(conv(x, p['w1'], stride, ((1, 1), (1, 1))),
                          p['bn1_g'], p['bn1_b'], p['bn1_m'], p['bn1_v']))
    out = bn(conv(inner, p['w2'], 1, ((1, 1), (1, 1))),
             p['bn2_g'], p['bn2_b'], p['bn2_m'], p['bn2_v'])
    if stride == 1:
        skip = x
    elif downsample == 'conv':
        skip = bn(conv(x, p['wd'], stride, ((0, 0), (0, 0))),
                  p['bnd_g'], p['bnd_b'], p['bnd_m'], p['bnd_v'])
    else:
        xs = x[:, :, ::stride, ::stride]
        skip = jnp.concatenate([xs, jnp.zeros_like(xs)], axis=1)
    return activation(out + skip)


# ----------------------------------- main ----------------------------------- #

def _make_params(key, c, c_out):
    ks = jax.random.split(key, 16)

    def nrm(k, shape, s=0.1):
        return (s * jax.random.normal(k, shape)).astype(jnp.float32)

    def bn_init(k, ch):
        k1, k2, k3, k4 = jax.random.split(k, 4)
        return ((1.0 + 0.1 * jax.random.normal(k1, (ch,))).astype(jnp.float32),
                nrm(k2, (ch,)), nrm(k3, (ch,)),
                jax.random.uniform(k4, (ch,), minval=0.5,
                                   maxval=1.5).astype(jnp.float32))

    p = {'w1': nrm(ks[0], (c_out, c, 3, 3)),
         'w2': nrm(ks[1], (c_out, c_out, 3, 3)),
         'wd': nrm(ks[2], (c_out, c, 1, 1))}
    for name, k, ch in (('bn1', ks[3], c_out), ('bn2', ks[4], c_out),
                        ('bnd', ks[5], c_out)):
        g, b, m, v = bn_init(k, ch)
        p[name + '_g'], p[name + '_b'] = g, b
        p[name + '_m'], p[name + '_v'] = m, v
    return p


if __name__ == "__main__":
    key = jax.random.PRNGKey(0)
    k_p1, k_x1, k_p2, k_x2 = jax.random.split(key, 4)

    # bf16 end-to-end (operands, residual, writeback) vs f32 reference.
    RTOL, ATOL = 2e-2, 4e-2

    # Case 1: stride=2, conv-downsample skip (C=8 -> C_out=16, 16x16 -> 8x8).
    c, c_out, n, h, w, stride = 8, 16, 2, 16, 16, 2
    params = _make_params(k_p1, c, c_out)
    x = jax.random.normal(k_x1, (n, c, h, w), dtype=jnp.float32)
    out = jax.block_until_ready(resnet_block_forward(x, params, stride))
    ref = jax.block_until_ready(reference_forward(x, params, stride))
    assert out.shape == ref.shape == (n, c_out, h // stride, w // stride)
    np.testing.assert_allclose(np.asarray(out), np.asarray(ref),
                               rtol=RTOL, atol=ATOL)

    # Case 2: stride=1, identity skip (C == C_out = 16).
    c1 = 16
    params1 = _make_params(k_p2, c1, c1)
    x1 = jax.random.normal(k_x2, (n, c1, h, w), dtype=jnp.float32)
    out1 = jax.block_until_ready(resnet_block_forward(x1, params1, 1))
    ref1 = jax.block_until_ready(reference_forward(x1, params1, 1))
    assert out1.shape == ref1.shape
    np.testing.assert_allclose(np.asarray(out1), np.asarray(ref1),
                               rtol=RTOL, atol=ATOL)

    print("KERNEL_OK")
</pallas_src>

<mosaic_0001>
module attributes {stable_mosaic.version = 11 : i64} {
  func.func @kernel(%arg0: i32, %arg1: memref<4x9x9x8xbf16, #tpu.memory_space<vmem>>, %arg2: memref<72x16xbf16, #tpu.memory_space<vmem>>, %arg3: memref<1x16xf32, #tpu.memory_space<vmem>>, %arg4: memref<1x64x16xbf16, #tpu.memory_space<vmem>>) attributes {dimension_semantics = [#tpu.dimension_semantics<parallel>], iteration_bounds = array<i64: 2>, scalar_prefetch = 0 : i64, scratch_operands = 0 : i64, tpu.core_type = #tpu.core_type<tc>, window_params = [{transform_indices = @transform_0, window_bounds = array<i64: 4, 9, 9, 8>}, {pipeline_mode = #tpu.pipeline_mode<synchronous>, transform_indices = @transform_1, window_bounds = array<i64: 72, 16>}, {pipeline_mode = #tpu.pipeline_mode<synchronous>, transform_indices = @transform_2, window_bounds = array<i64: 1, 16>}, {transform_indices = @transform_3, window_bounds = array<i64: 1, 64, 16>}]} {
    %c0 = arith.constant 0 : index
    %c0_0 = arith.constant 0 : index
    %c0_1 = arith.constant 0 : index
    %c0_2 = arith.constant 0 : index
    %0 = vector.load %arg1[%c0, %c0_0, %c0_1, %c0_2] : memref<4x9x9x8xbf16, #tpu.memory_space<vmem>>, vector<1x9x9x8xbf16>
    %1 = vector.shape_cast %0 : vector<1x9x9x8xbf16> to vector<9x9x8xbf16>
    %2 = arith.extf %1 : vector<9x9x8xbf16> to vector<9x9x8xf32>
    %c1 = arith.constant 1 : index
    %c0_3 = arith.constant 0 : index
    %c0_4 = arith.constant 0 : index
    %c0_5 = arith.constant 0 : index
    %3 = vector.load %arg1[%c1, %c0_3, %c0_4, %c0_5] : memref<4x9x9x8xbf16, #tpu.memory_space<vmem>>, vector<1x9x9x8xbf16>
    %4 = vector.shape_cast %3 : vector<1x9x9x8xbf16> to vector<9x9x8xbf16>
    %5 = arith.extf %4 : vector<9x9x8xbf16> to vector<9x9x8xf32>
    %c2 = arith.constant 2 : index
    %c0_6 = arith.constant 0 : index
    %c0_7 = arith.constant 0 : index
    %c0_8 = arith.constant 0 : index
    %6 = vector.load %arg1[%c2, %c0_6, %c0_7, %c0_8] : memref<4x9x9x8xbf16, #tpu.memory_space<vmem>>, vector<1x9x9x8xbf16>
    %7 = vector.shape_cast %6 : vector<1x9x9x8xbf16> to vector<9x9x8xbf16>
    %8 = arith.extf %7 : vector<9x9x8xbf16> to vector<9x9x8xf32>
    %c3 = arith.constant 3 : index
    %c0_9 = arith.constant 0 : index
    %c0_10 = arith.constant 0 : index
    %c0_11 = arith.constant 0 : index
    %9 = vector.load %arg1[%c3, %c0_9, %c0_10, %c0_11] : memref<4x9x9x8xbf16, #tpu.memory_space<vmem>>, vector<1x9x9x8xbf16>
    %10 = vector.shape_cast %9 : vector<1x9x9x8xbf16> to vector<9x9x8xbf16>
    %11 = arith.extf %10 : vector<9x9x8xbf16> to vector<9x9x8xf32>
    %12 = vector.extract_strided_slice %2 {offsets = [0, 0, 0], sizes = [8, 8, 8], strides = [1, 1, 1]} : vector<9x9x8xf32> to vector<8x8x8xf32>
    %13 = vector.extract_strided_slice %5 {offsets = [0, 0, 0], sizes = [8, 8, 8], strides = [1, 1, 1]} : vector<9x9x8xf32> to vector<8x8x8xf32>
    %14 = vector.extract_strided_slice %2 {offsets = [0, 1, 0], sizes = [8, 8, 8], strides = [1, 1, 1]} : vector<9x9x8xf32> to vector<8x8x8xf32>
    %15 = vector.extract_strided_slice %8 {offsets = [0, 0, 0], sizes = [8, 8, 8], strides = [1, 1, 1]} : vector<9x9x8xf32> to vector<8x8x8xf32>
    %16 = vector.extract_strided_slice %11 {offsets = [0, 0, 0], sizes = [8, 8, 8], strides = [1, 1, 1]} : vector<9x9x8xf32> to vector<8x8x8xf32>
    %17 = vector.extract_strided_slice %8 {offsets = [0, 1, 0], sizes = [8, 8, 8], strides = [1, 1, 1]} : vector<9x9x8xf32> to vector<8x8x8xf32>
    %18 = vector.extract_strided_slice %2 {offsets = [1, 0, 0], sizes = [8, 8, 8], strides = [1, 1, 1]} : vector<9x9x8xf32> to vector<8x8x8xf32>
    %19 = vector.extract_strided_slice %5 {offsets = [1, 0, 0], sizes = [8, 8, 8], strides = [1, 1, 1]} : vector<9x9x8xf32> to vector<8x8x8xf32>
    %20 = vector.extract_strided_slice %2 {offsets = [1, 1, 0], sizes = [8, 8, 8], strides = [1, 1, 1]} : vector<9x9x8xf32> to vector<8x8x8xf32>
    %21 = tpu.concatenate %12, %13, %14, %15, %16, %17, %18, %19, %20 in 2 : vector<8x8x8xf32>, vector<8x8x8xf32>, vector<8x8x8xf32>, vector<8x8x8xf32>, vector<8x8x8xf32>, vector<8x8x8xf32>, vector<8x8x8xf32>, vector<8x8x8xf32>, vector<8x8x8xf32> -> vector<8x8x72xf32>
    %22 = vector.shape_cast %21 : vector<8x8x72xf32> to vector<64x72xf32>
    %23 = arith.truncf %22 : vector<64x72xf32> to vector<64x72xbf16>
    %c0_12 = arith.constant 0 : index
    %c0_13 = arith.constant 0 : index
    %24 = vector.load %arg2[%c0_12, %c0_13] : memref<72x16xbf16, #tpu.memory_space<vmem>>, vector<72x16xbf16>
    %cst = arith.constant dense<0.000000e+00> : vector<64x16xf32>
    %25 = tpu.matmul %23, %24, %cst {dimension_numbers = #tpu.dot_dimension_numbers<[1], [0], [0], [1], [0, 0, 1, 1], [], []>} : vector<64x72xbf16>, vector<72x16xbf16>, vector<64x16xf32> -> vector<64x16xf32>
    %c0_14 = arith.constant 0 : index
    %c0_15 = arith.constant 0 : index
    %26 = vector.load %arg3[%c0_14, %c0_15] : memref<1x16xf32, #tpu.memory_space<vmem>>, vector<1x16xf32>
    %27 = vector.broadcast %26 : vector<1x16xf32> to vector<64x16xf32>
    %28 = arith.addf %25, %27 : vector<64x16xf32>
    %cst_16 = arith.constant 0.000000e+00 : f32
    %29 = vector.broadcast %cst_16 : f32 to vector<64x16xf32>
    %30 = arith.maximumf %28, %29 : vector<64x16xf32>
    %31 = arith.truncf %30 : vector<64x16xf32> to vector<64x16xbf16>
    %c0_17 = arith.constant 0 : index
    %c0_18 = arith.constant 0 : index
    %c0_19 = arith.constant 0 : index
    %32 = vector.load %arg4[%c0_17, %c0_18, %c0_19] : memref<1x64x16xbf16, #tpu.memory_space<vmem>>, vector<1x64x16xbf16>
    %33 = vector.shape_cast %32 : vector<1x64x16xbf16> to vector<64x16xbf16>
    %34 = vector.shape_cast %31 : vector<64x16xbf16> to vector<1x64x16xbf16>
    tpu.vector_store %arg4[%c0_17, %c0_18, %c0_19], %34 {strides = array<i32>} : memref<1x64x16xbf16, #tpu.memory_space<vmem>>, vector<1x64x16xbf16>,
    return
  }
  func.func @transform_0(%arg0: i32) -> (i32, i32, i32, i32) {
    %c0_i32 = arith.constant 0 : i32
    %c0_i32_0 = arith.constant 0 : i32
    %c0_i32_1 = arith.constant 0 : i32
    %c0_i32_2 = arith.constant 0 : i32
    return %arg0, %c0_i32, %c0_i32_0, %c0_i32_1 : i32, i32, i32, i32
  }
  func.func @transform_1(%arg0: i32) -> (i32, i32) {
    %c0_i32 = arith.constant 0 : i32
    %c0_i32_0 = arith.constant 0 : i32
    %c0_i32_1 = arith.constant 0 : i32
    return %c0_i32, %c0_i32_0 : i32, i32
  }
  func.func @transform_2(%arg0: i32) -> (i32, i32) {
    %c0_i32 = arith.constant 0 : i32
    %c0_i32_0 = arith.constant 0 : i32
    %c0_i32_1 = arith.constant 0 : i32
    return %c0_i32, %c0_i32_0 : i32, i32
  }
  func.func @transform_3(%arg0: i32) -> (i32, i32, i32) {
    %c0_i32 = arith.constant 0 : i32
    %c0_i32_0 = arith.constant 0 : i32
    %c0_i32_1 = arith.constant 0 : i32
    return %arg0, %c0_i32, %c0_i32_0 : i32, i32, i32
  }
}

</mosaic_0001>

<llo_original>
// kernel: tpu_custom_call.1
$region0: #{tpu_custom_call.1}
  #allocation0 [shape = 'u32[]', space=smem, size = 0x4, offset = 0x4, fixed_abs, tag = 'smem constant byte address 0x4 - core index']
  #allocation1 [shape = 'u32[144,128]{1,0:T(1,128)}', space=vmem, size = 0x12000, scoped, tag = 'internal scratch']
  %s0 = inlined_call_operand.vmem [shape: bf16[8,9,9,8], index: 0, kind: input, shape index: {}]
  %s1 = inlined_call_operand.vmem [shape: bf16[72,16], index: 1, kind: input, shape index: {}]
  %s2 = inlined_call_operand.vmem [shape: f32[1,16], index: 2, kind: input, shape index: {}]
  %s3 = inlined_call_operand.vmem [shape: bf16[2,64,16], index: 3, kind: output, shape index: {}]
  %s4 = sld [smem:[#allocation0]]
  $region45: #{tpu_custom_call.1} parent=0
    _
  %s6 = ssub.s32 1, %s4
  %s7 = scalar_select 0, %s6, %s4
  loop: start=0, step=1, limit=4
  $region2: #{tpu_custom_call.1} parent=0 // loop_pre_header
    _
  $region3: #{tpu_custom_call.1} parent=0 // loop_header
    %s9 = sphi 0, %s13
    %p10 = scmp.ge.s32.totalorder %s9, 4
    %s19 = sphi 0, %s21
    %s22 = sphi 0, %s19
    %s23 = sphi 0, %s22
    %s39 = sphi 0, %s23
    %s43 = sphi 0, %s43
    %s45 = sphi 0, %s43
    %s46 = sphi 0, %s45
    %s60 = sphi 0, %s46
    %s64 = sphi 0, %s64
    %s66 = sphi 0, %s64
    %s67 = sphi 0, %s66
    %s81 = sphi 0, %s67
    %s87 = sphi 0, %s89
    %s90 = sphi 0, %s87
    %s91 = sphi 0, %s90
    %s107 = sphi 0, %s91
  $region4: #{tpu_custom_call.1} parent=0 // loop_header_branch
    %12 = sbr.rel (%p10) target = $region8
  $region5: #{tpu_custom_call.1} parent=0 // loop_body
    %s14 = ssub.s32 %s9, 1
    %s15 = ssub.s32 %s9, 2
    %s16 = sadd.s32 %s9, 1
    %s17 = ssub.s32 %s9, %s16
    %p18 = scmp.eq.s32.totalorder %s17, 0
    %s20 = sadd.s32 %s19, 1
    %s21 = scalar_select %p18, %s19, %s20
    %p24 = pneg %p18
    %p25 = scmp.eq.s32.totalorder %s9, 1
    %p26 = por %p24, %p25
    %p27 = scmp.ne.s32.totalorder %s19, %s22
    %p28 = scmp.eq.s32.totalorder %s9, 0
    %p29 = por %p27, %p28
    %p30 = scmp.ne.s32.totalorder %s19, %s22
    %p31 = scmp.eq.s32.totalorder %s14, 1
    %p32 = por %p30, %p31
    %p33 = scmp.ne.s32.totalorder %s22, %s23
    %p34 = scmp.eq.s32.totalorder %s14, 0
    %p35 = por %p33, %p34
    %p36 = scmp.ne.s32.totalorder %s22, %s23
    %p37 = scmp.eq.s32.totalorder %s15, 1
    %p38 = por %p36, %p37
    %p40 = scmp.ne.s32.totalorder %s23, %s39
    %p41 = scmp.eq.s32.totalorder %s15, 0
    %p42 = por %p40, %p41
    %s44 = sadd.s32 %s43, 1
    %p47 = scmp.eq.s32.totalorder %s9, 1
    %p48 = scmp.ne.s32.totalorder %s43, %s45
    %p49 = scmp.eq.s32.totalorder %s9, 0
    %p50 = por %p48, %p49
    %p51 = scmp.ne.s32.totalorder %s43, %s45
    %p52 = scmp.eq.s32.totalorder %s14, 1
    %p53 = por %p51, %p52
    %p54 = scmp.ne.s32.totalorder %s45, %s46
    %p55 = scmp.eq.s32.totalorder %s14, 0
    %p56 = por %p54, %p55
    %p57 = scmp.ne.s32.totalorder %s45, %s46
    %p58 = scmp.eq.s32.totalorder %s15, 1
    %p59 = por %p57, %p58
    %p61 = scmp.ne.s32.totalorder %s46, %s60
    %p62 = scmp.eq.s32.totalorder %s15, 0
    %p63 = por %p61, %p62
    %s65 = sadd.s32 %s64, 1
    %p68 = scmp.eq.s32.totalorder %s9, 1
    %p69 = scmp.ne.s32.totalorder %s64, %s66
    %p70 = scmp.eq.s32.totalorder %s9, 0
    %p71 = por %p69, %p70
    %p72 = scmp.ne.s32.totalorder %s64, %s66
    %p73 = scmp.eq.s32.totalorder %s14, 1
    %p74 = por %p72, %p73
    %p75 = scmp.ne.s32.totalorder %s66, %s67
    %p76 = scmp.eq.s32.totalorder %s14, 0
    %p77 = por %p75, %p76
    %p78 = scmp.ne.s32.totalorder %s66, %s67
    %p79 = scmp.eq.s32.totalorder %s15, 1
    %p80 = por %p78, %p79
    %p82 = scmp.ne.s32.totalorder %s67, %s81
    %p83 = scmp.eq.s32.totalorder %s15, 0
    %p84 = por %p82, %p83
    %s85 = ssub.s32 %s9, %s16
    %p86 = scmp.eq.s32.totalorder %s85, 0
    %s88 = sadd.s32 %s87, 1
    %s89 = scalar_select %p86, %s87, %s88
    %p92 = pneg %p86
    %p93 = scmp.eq.s32.totalorder %s9, 1
    %p94 = por %p92, %p93
    %p95 = scmp.ne.s32.totalorder %s87, %s90
    %p96 = scmp.eq.s32.totalorder %s9, 0
    %p97 = por %p95, %p96
    %p98 = scmp.ne.s32.totalorder %s87, %s90
    %p99 = scmp.eq.s32.totalorder %s14, 1
    %p100 = por %p98, %p99
    %p101 = scmp.ne.s32.totalorder %s90, %s91
    %p102 = scmp.eq.s32.totalorder %s14, 0
    %p103 = por %p101, %p102
    %p104 = scmp.ne.s32.totalorder %s90, %s91
    %p105 = scmp.eq.s32.totalorder %s15, 1
    %p106 = por %p104, %p105
    %p108 = scmp.ne.s32.totalorder %s91, %s107
    %p109 = scmp.eq.s32.totalorder %s15, 0
    %p110 = por %p108, %p109
    %p111 = scmp.le.s32.totalorder 1, %s9
    %p112 = scmp.lt.s32.totalorder %s9, 3
    %p113 = pnand %p111, %p112
    %p114 = pneg %p113
    // Predicated region
    $region9: #{tpu_custom_call.1} parent=5 // pred_check
      _
    $region10: #{tpu_custom_call.1} parent=5 // pred_check_branch
      %116 = sbr.rel (%p113) target = $region12
    $region11: #{tpu_custom_call.1} parent=5 // pred_region
      %s117 = ssub.s32 %s9, 1
      // Predicated region
      $region13: #{tpu_custom_call.1} parent=11 // pred_check
        %p118 = pneg %p56
      $region14: #{tpu_custom_call.1} parent=11 // pred_check_branch
        %120 = sbr.rel (%p118) target = $region16
      $region15: #{tpu_custom_call.1} parent=11 // pred_region
        _
      $region16: #{tpu_custom_call.1} parent=11 // pred_fallthru
        _
      // Predicated region
      $region17: #{tpu_custom_call.1} parent=11 // pred_check
        %p121 = pneg %p77
      $region18: #{tpu_custom_call.1} parent=11 // pred_check_branch
        %123 = sbr.rel (%p121) target = $region20
      $region19: #{tpu_custom_call.1} parent=11 // pred_region
        _
      $region20: #{tpu_custom_call.1} parent=11 // pred_fallthru
        _
    $region12: #{tpu_custom_call.1} parent=5 // pred_fallthru
      _
    %p124 = scmp.lt.s32.totalorder %s9, 2
    // Predicated region
    $region21: #{tpu_custom_call.1} parent=5 // pred_check
      %p125 = pneg %p124
    $region22: #{tpu_custom_call.1} parent=5 // pred_check_branch
      %127 = sbr.rel (%p125) target = $region24
    $region23: #{tpu_custom_call.1} parent=5 // pred_region
      // Predicated region
      $region25: #{tpu_custom_call.1} parent=23 // pred_check
        %p128 = pneg %p29
      $region26: #{tpu_custom_call.1} parent=23 // pred_check_branch
        %130 = sbr.rel (%p128) target = $region28
      $region27: #{tpu_custom_call.1} parent=23 // pred_region
        %s131 = smul.u32 4, %s9
        %p132 = scmp.lt.s32.totalorder %s131, 7
        %s133 = scalar_select %p132, %s131, 7
        %s134 = smul.addr %s133, 18
        %s135 = smul.addr %s134, 4
        %s136 = scalar_lea.vmem %s0, %s135
        %s137 = smul.u32 4, %s9
      $region28: #{tpu_custom_call.1} parent=23 // pred_fallthru
        _
    $region24: #{tpu_custom_call.1} parent=5 // pred_fallthru
      _
    %p138 = scmp.le.s32.totalorder 1, %s9
    %p139 = scmp.lt.s32.totalorder %s9, 3
    %p140 = pnand %p138, %p139
    %p141 = pneg %p140
    // Predicated region
    $region29: #{tpu_custom_call.1} parent=5 // pred_check
      _
    $region30: #{tpu_custom_call.1} parent=5 // pred_check_branch
      %143 = sbr.rel (%p140) target = $region32
    $region31: #{tpu_custom_call.1} parent=5 // pred_region
      %s144 = ssub.s32 %s9, 1
      %s145 = smul.u32 4, %s14
      %p146 = scmp.lt.s32.totalorder %s145, 7
      %s147 = scalar_select %p146, %s145, 7
      %s148 = smul.addr %s147, 18
      %s149 = smul.addr %s148, 4
      %s150 = scalar_lea.vmem %s0, %s149
      %p151 = pneg %p35
      %p152 = pneg %p32
      %p153 = pneg %p56
      %p154 = pneg %p53
      %p155 = pneg %p77
      %p156 = pneg %p74
      %p157 = pneg %p103
      %p158 = pneg %p100
      %p159 = scmp.lt.s32.totalorder %s14, 1
      %s160 = scalar_select %p159, %s14, 1
      %s161 = smul.addr %s160, 8
      %s162 = smul.addr %s161, 4
      %s163 = scalar_lea.vmem %s3, %s162
      %s164 = smul.u32 4, %s14
      %p165 = scmp.lt.s32.totalorder %s164, 7
      %s166 = scalar_select %p165, %s164, 7
      %s167 = smul.addr %s166, 18
      %s168 = smul.addr %s167, 4
      %s169 = scalar_lea.vmem %s0, %s168
      %s170 = smul.u32 4, %s14
      %p171 = scmp.lt.s32.totalorder %s14, 1
      %s172 = scalar_select %p171, %s14, 1
      %s173 = smul.addr %s172, 8
      %s174 = smul.addr %s173, 4
      %s175 = scalar_lea.vmem %s3, %s174
      %v177 = vld [vmem:[%s169] sm:$0xf]
      %v178 = vld [vmem:[%s169 + $0x4] sm:$0x1]
      %v179 = vld [vmem:[%s169 + $0x8] sm:$0xf]
      %v180 = vld [vmem:[%s169 + $0xc] sm:$0x1]
      %v181 = vld [vmem:[%s169 + $0x10] sm:$0xf]
      %v182 = vld [vmem:[%s169 + $0x14] sm:$0x1]
      %v183 = vld [vmem:[%s169 + $0x18] sm:$0xf]
      %v184 = vld [vmem:[%s169 + $0x1c] sm:$0x1]
      %v185 = vld [vmem:[%s169 + $0x20] sm:$0xf]
      %v186 = vld [vmem:[%s169 + $0x24] sm:$0x1]
      %v187 = vld [vmem:[%s169 + $0x28] sm:$0xf]
      %v188 = vld [vmem:[%s169 + $0x2c] sm:$0x1]
      %v189 = vld [vmem:[%s169 + $0x30] sm:$0xf]
      %v190 = vld [vmem:[%s169 + $0x34] sm:$0x1]
      %v191 = vld [vmem:[%s169 + $0x38] sm:$0xf]
      %v192 = vld [vmem:[%s169 + $0x3c] sm:$0x1]
      %v193 = vld [vmem:[%s169 + $0x40] sm:$0xf]
      %v194 = vld [vmem:[%s169 + $0x44] sm:$0x1]
      %v195 = vunpack.c.l.bf16 %v177
      %v196 = vunpack.c.l.bf16 %v178
      %v197 = vunpack.c.l.bf16 %v179
      %v198 = vunpack.c.l.bf16 %v180
      %v199 = vunpack.c.l.bf16 %v181
      %v200 = vunpack.c.l.bf16 %v182
      %v201 = vunpack.c.l.bf16 %v183
      %v202 = vunpack.c.l.bf16 %v184
      %v203 = vunpack.c.l.bf16 %v185
      %v204 = vunpack.c.l.bf16 %v186
      %v205 = vunpack.c.l.bf16 %v187
      %v206 = vunpack.c.l.bf16 %v188
      %v207 = vunpack.c.l.bf16 %v189
      %v208 = vunpack.c.l.bf16 %v190
      %v209 = vunpack.c.l.bf16 %v191
      %v210 = vunpack.c.l.bf16 %v192
      %v211 = vunpack.c.l.bf16 %v193
      %v212 = vunpack.c.l.bf16 %v194
      %s213 = scalar_lea.vmem %s169, 72
      %v214 = vld [vmem:[%s213] sm:$0xf]
      %v215 = vld [vmem:[%s213 + $0x8] sm:$0xf]
      %v216 = vld [vmem:[%s213 + $0x10] sm:$0xf]
      %v217 = vld [vmem:[%s213 + $0x18] sm:$0xf]
      %v218 = vld [vmem:[%s213 + $0x20] sm:$0xf]
      %v219 = vld [vmem:[%s213 + $0x28] sm:$0xf]
      %v220 = vld [vmem:[%s213 + $0x30] sm:$0xf]
      %v221 = vld [vmem:[%s213 + $0x38] sm:$0xf]
      %v222 = vld [vmem:[%s213 + $0x40] sm:$0xf]
      %v223 = vunpack.c.l.bf16 %v214
      %v224 = vunpack.c.l.bf16 %v215
      %v225 = vunpack.c.l.bf16 %v216
      %v226 = vunpack.c.l.bf16 %v217
      %v227 = vunpack.c.l.bf16 %v218
      %v228 = vunpack.c.l.bf16 %v219
      %v229 = vunpack.c.l.bf16 %v220
      %v230 = vunpack.c.l.bf16 %v221
      %v231 = vunpack.c.l.bf16 %v222
      %s232 = scalar_lea.vmem %s169, 144
      %v233 = vld [vmem:[%s232] sm:$0xf]
      %v234 = vld [vmem:[%s232 + $0x4] sm:$0x1]
      %v235 = vld [vmem:[%s232 + $0x8] sm:$0xf]
      %v236 = vld [vmem:[%s232 + $0xc] sm:$0x1]
      %v237 = vld [vmem:[%s232 + $0x10] sm:$0xf]
      %v238 = vld [vmem:[%s232 + $0x14] sm:$0x1]
      %v239 = vld [vmem:[%s232 + $0x18] sm:$0xf]
      %v240 = vld [vmem:[%s232 + $0x1c] sm:$0x1]
      %v241 = vld [vmem:[%s232 + $0x20] sm:$0xf]
      %v242 = vld [vmem:[%s232 + $0x24] sm:$0x1]
      %v243 = vld [vmem:[%s232 + $0x28] sm:$0xf]
      %v244 = vld [vmem:[%s232 + $0x2c] sm:$0x1]
      %v245 = vld [vmem:[%s232 + $0x30] sm:$0xf]
      %v246 = vld [vmem:[%s232 + $0x34] sm:$0x1]
      %v247 = vld [vmem:[%s232 + $0x38] sm:$0xf]
      %v248 = vld [vmem:[%s232 + $0x3c] sm:$0x1]
      %v249 = vunpack.c.l.bf16 %v233
      %v250 = vunpack.c.l.bf16 %v234
      %v251 = vunpack.c.l.bf16 %v235
      %v252 = vunpack.c.l.bf16 %v236
      %v253 = vunpack.c.l.bf16 %v237
      %v254 = vunpack.c.l.bf16 %v238
      %v255 = vunpack.c.l.bf16 %v239
      %v256 = vunpack.c.l.bf16 %v240
      %v257 = vunpack.c.l.bf16 %v241
      %v258 = vunpack.c.l.bf16 %v242
      %v259 = vunpack.c.l.bf16 %v243
      %v260 = vunpack.c.l.bf16 %v244
      %v261 = vunpack.c.l.bf16 %v245
      %v262 = vunpack.c.l.bf16 %v246
      %v263 = vunpack.c.l.bf16 %v247
      %v264 = vunpack.c.l.bf16 %v248
      %s265 = scalar_lea.vmem %s169, 216
      %v266 = vld [vmem:[%s265] sm:$0xf]
      %v267 = vld [vmem:[%s265 + $0x8] sm:$0xf]
      %v268 = vld [vmem:[%s265 + $0x10] sm:$0xf]
      %v269 = vld [vmem:[%s265 + $0x18] sm:$0xf]
      %v270 = vld [vmem:[%s265 + $0x20] sm:$0xf]
      %v271 = vld [vmem:[%s265 + $0x28] sm:$0xf]
      %v272 = vld [vmem:[%s265 + $0x30] sm:$0xf]
      %v273 = vld [vmem:[%s265 + $0x38] sm:$0xf]
      %v274 = vunpack.c.l.bf16 %v266
      %v275 = vunpack.c.l.bf16 %v267
      %v276 = vunpack.c.l.bf16 %v268
      %v277 = vunpack.c.l.bf16 %v269
      %v278 = vunpack.c.l.bf16 %v270
      %v279 = vunpack.c.l.bf16 %v271
      %v280 = vunpack.c.l.bf16 %v272
      %v281 = vunpack.c.l.bf16 %v273
      %290 = vrot.lane.b32.xlu0 %v223, 8
      %v291 = vpop.permute.xlu0 %290
      %292 = vrot.lane.b32.xlu0 %v224, 8
      %v293 = vpop.permute.xlu0 %292
      %294 = vrot.lane.b32.xlu0 %v225, 8
      %v295 = vpop.permute.xlu0 %294
      %296 = vrot.lane.b32.xlu0 %v226, 8
      %v297 = vpop.permute.xlu0 %296
      %298 = vrot.lane.b32.xlu0 %v227, 8
      %v299 = vpop.permute.xlu0 %298
      %300 = vrot.lane.b32.xlu0 %v228, 8
      %v301 = vpop.permute.xlu0 %300
      %302 = vrot.lane.b32.xlu0 %v229, 8
      %v303 = vpop.permute.xlu0 %302
      %304 = vrot.lane.b32.xlu0 %v230, 8
      %v305 = vpop.permute.xlu0 %304
      %vm330 = vcmask 1046528
      %v331 = vrot.slane %v195, 1
      %v332 = vrot.slane %v196, 1
      %v333 = vsel %vm330, %v331, %v332
      %v334 = vrot.slane %v197, 1
      %v335 = vrot.slane %v198, 1
      %v336 = vsel %vm330, %v334, %v335
      %v337 = vrot.slane %v199, 1
      %v338 = vrot.slane %v200, 1
      %v339 = vsel %vm330, %v337, %v338
      %v340 = vrot.slane %v201, 1
      %v341 = vrot.slane %v202, 1
      %v342 = vsel %vm330, %v340, %v341
      %v343 = vrot.slane %v203, 1
      %v344 = vrot.slane %v204, 1
      %v345 = vsel %vm330, %v343, %v344
      %v346 = vrot.slane %v205, 1
      %v347 = vrot.slane %v206, 1
      %v348 = vsel %vm330, %v346, %v347
      %v349 = vrot.slane %v207, 1
      %v350 = vrot.slane %v208, 1
      %v351 = vsel %vm330, %v349, %v350
      %v352 = vrot.slane %v209, 1
      %v353 = vrot.slane %v210, 1
      %v354 = vsel %vm330, %v352, %v353
      %355 = vrot.lane.b32.xlu0 %v333, 16
      %v356 = vpop.permute.xlu0 %355
      %357 = vrot.lane.b32.xlu0 %v336, 16
      %v358 = vpop.permute.xlu0 %357
      %359 = vrot.lane.b32.xlu0 %v339, 16
      %v360 = vpop.permute.xlu0 %359
      %361 = vrot.lane.b32.xlu0 %v342, 16
      %v362 = vpop.permute.xlu0 %361
      %363 = vrot.lane.b32.xlu0 %v345, 16
      %v364 = vpop.permute.xlu0 %363
      %365 = vrot.lane.b32.xlu0 %v348, 16
      %v366 = vpop.permute.xlu0 %365
      %367 = vrot.lane.b32.xlu0 %v351, 16
      %v368 = vpop.permute.xlu0 %367
      %369 = vrot.lane.b32.xlu0 %v354, 16
      %v370 = vpop.permute.xlu0 %369
      %387 = vrot.lane.b32.xlu0 %v249, 24
      %v388 = vpop.permute.xlu0 %387
      %389 = vrot.lane.b32.xlu0 %v251, 24
      %v390 = vpop.permute.xlu0 %389
      %391 = vrot.lane.b32.xlu0 %v253, 24
      %v392 = vpop.permute.xlu0 %391
      %393 = vrot.lane.b32.xlu0 %v255, 24
      %v394 = vpop.permute.xlu0 %393
      %395 = vrot.lane.b32.xlu0 %v257, 24
      %v396 = vpop.permute.xlu0 %395
      %397 = vrot.lane.b32.xlu0 %v259, 24
      %v398 = vpop.permute.xlu0 %397
      %399 = vrot.lane.b32.xlu0 %v261, 24
      %v400 = vpop.permute.xlu0 %399
      %401 = vrot.lane.b32.xlu0 %v263, 24
      %v402 = vpop.permute.xlu0 %401
      %419 = vrot.lane.b32.xlu0 %v274, 32
      %v420 = vpop.permute.xlu0 %419
      %421 = vrot.lane.b32.xlu0 %v275, 32
      %v422 = vpop.permute.xlu0 %421
      %423 = vrot.lane.b32.xlu0 %v276, 32
      %v424 = vpop.permute.xlu0 %423
      %425 = vrot.lane.b32.xlu0 %v277, 32
      %v426 = vpop.permute.xlu0 %425
      %427 = vrot.lane.b32.xlu0 %v278, 32
      %v428 = vpop.permute.xlu0 %427
      %429 = vrot.lane.b32.xlu0 %v279, 32
      %v430 = vpop.permute.xlu0 %429
      %431 = vrot.lane.b32.xlu0 %v280, 32
      %v432 = vpop.permute.xlu0 %431
      %433 = vrot.lane.b32.xlu0 %v281, 32
      %v434 = vpop.permute.xlu0 %433
      %v451 = vrot.slane %v249, 1
      %v452 = vrot.slane %v250, 1
      %v453 = vsel %vm330, %v451, %v452
      %v454 = vrot.slane %v251, 1
      %v455 = vrot.slane %v252, 1
      %v456 = vsel %vm330, %v454, %v455
      %v457 = vrot.slane %v253, 1
      %v458 = vrot.slane %v254, 1
      %v459 = vsel %vm330, %v457, %v458
      %v460 = vrot.slane %v255, 1
      %v461 = vrot.slane %v256, 1
      %v462 = vsel %vm330, %v460, %v461
      %v463 = vrot.slane %v257, 1
      %v464 = vrot.slane %v258, 1
      %v465 = vsel %vm330, %v463, %v464
      %v466 = vrot.slane %v259, 1
      %v467 = vrot.slane %v260, 1
      %v468 = vsel %vm330, %v466, %v467
      %v469 = vrot.slane %v261, 1
      %v470 = vrot.slane %v262, 1
      %v471 = vsel %vm330, %v469, %v470
      %v472 = vrot.slane %v263, 1
      %v473 = vrot.slane %v264, 1
      %v474 = vsel %vm330, %v472, %v473
      %475 = vrot.lane.b32.xlu0 %v453, 40
      %v476 = vpop.permute.xlu0 %475
      %477 = vrot.lane.b32.xlu0 %v456, 40
      %v478 = vpop.permute.xlu0 %477
      %479 = vrot.lane.b32.xlu0 %v459, 40
      %v480 = vpop.permute.xlu0 %479
      %481 = vrot.lane.b32.xlu0 %v462, 40
      %v482 = vpop.permute.xlu0 %481
      %483 = vrot.lane.b32.xlu0 %v465, 40
      %v484 = vpop.permute.xlu0 %483
      %485 = vrot.lane.b32.xlu0 %v468, 40
      %v486 = vpop.permute.xlu0 %485
      %487 = vrot.lane.b32.xlu0 %v471, 40
      %v488 = vpop.permute.xlu0 %487
      %489 = vrot.lane.b32.xlu0 %v474, 40
      %v490 = vpop.permute.xlu0 %489
      %500 = vrot.lane.b32.xlu0 %v197, 48
      %v501 = vpop.permute.xlu0 %500
      %502 = vrot.lane.b32.xlu0 %v199, 48
      %v503 = vpop.permute.xlu0 %502
      %504 = vrot.lane.b32.xlu0 %v201, 48
      %v505 = vpop.permute.xlu0 %504
      %506 = vrot.lane.b32.xlu0 %v203, 48
      %v507 = vpop.permute.xlu0 %506
      %508 = vrot.lane.b32.xlu0 %v205, 48
      %v509 = vpop.permute.xlu0 %508
      %510 = vrot.lane.b32.xlu0 %v207, 48
      %v511 = vpop.permute.xlu0 %510
      %512 = vrot.lane.b32.xlu0 %v209, 48
      %v513 = vpop.permute.xlu0 %512
      %514 = vrot.lane.b32.xlu0 %v211, 48
      %v515 = vpop.permute.xlu0 %514
      %525 = vrot.lane.b32.xlu0 %v224, 56
      %v526 = vpop.permute.xlu0 %525
      %527 = vrot.lane.b32.xlu0 %v225, 56
      %v528 = vpop.permute.xlu0 %527
      %529 = vrot.lane.b32.xlu0 %v226, 56
      %v530 = vpop.permute.xlu0 %529
      %531 = vrot.lane.b32.xlu0 %v227, 56
      %v532 = vpop.permute.xlu0 %531
      %533 = vrot.lane.b32.xlu0 %v228, 56
      %v534 = vpop.permute.xlu0 %533
      %535 = vrot.lane.b32.xlu0 %v229, 56
      %v536 = vpop.permute.xlu0 %535
      %537 = vrot.lane.b32.xlu0 %v230, 56
      %v538 = vpop.permute.xlu0 %537
      %539 = vrot.lane.b32.xlu0 %v231, 56
      %v540 = vpop.permute.xlu0 %539
      %v550 = vrot.slane %v211, 1
      %v551 = vrot.slane %v212, 1
      %v552 = vsel %vm330, %v550, %v551
      %553 = vrot.lane.b32.xlu0 %v336, 64
      %v554 = vpop.permute.xlu0 %553
      %555 = vrot.lane.b32.xlu0 %v339, 64
      %v556 = vpop.permute.xlu0 %555
      %557 = vrot.lane.b32.xlu0 %v342, 64
      %v558 = vpop.permute.xlu0 %557
      %559 = vrot.lane.b32.xlu0 %v345, 64
      %v560 = vpop.permute.xlu0 %559
      %561 = vrot.lane.b32.xlu0 %v348, 64
      %v562 = vpop.permute.xlu0 %561
      %563 = vrot.lane.b32.xlu0 %v351, 64
      %v564 = vpop.permute.xlu0 %563
      %565 = vrot.lane.b32.xlu0 %v354, 64
      %v566 = vpop.permute.xlu0 %565
      %567 = vrot.lane.b32.xlu0 %v552, 64
      %v568 = vpop.permute.xlu0 %567
      %vm577 = vcmask 64512
      %v578 = vsel %vm577, %v195, %v291
      %v579 = vsel %vm577, %v197, %v293
      %v580 = vsel %vm577, %v199, %v295
      %v581 = vsel %vm577, %v201, %v297
      %v582 = vsel %vm577, %v203, %v299
      %v583 = vsel %vm577, %v205, %v301
      %v584 = vsel %vm577, %v207, %v303
      %v585 = vsel %vm577, %v209, %v305
      %vm586 = vcmask 130048
      %v587 = vsel %vm586, %v578, %v356
      %v588 = vsel %vm586, %v579, %v358
      %v589 = vsel %vm586, %v580, %v360
      %v590 = vsel %vm586, %v581, %v362
      %v591 = vsel %vm586, %v582, %v364
      %v592 = vsel %vm586, %v583, %v366
      %v593 = vsel %vm586, %v584, %v368
      %v594 = vsel %vm586, %v585, %v370
      %vm595 = vcmask 195584
      %v596 = vsel %vm595, %v587, %v388
      %v597 = vsel %vm595, %v588, %v390
      %v598 = vsel %vm595, %v589, %v392
      %v599 = vsel %vm595, %v590, %v394
      %v600 = vsel %vm595, %v591, %v396
      %v601 = vsel %vm595, %v592, %v398
      %v602 = vsel %vm595, %v593, %v400
      %v603 = vsel %vm595, %v594, %v402
      %vm604 = vcmask 261120
      %v605 = vsel %vm604, %v596, %v420
      %v606 = vsel %vm604, %v597, %v422
      %v607 = vsel %vm604, %v598, %v424
      %v608 = vsel %vm604, %v599, %v426
      %v609 = vsel %vm604, %v600, %v428
      %v610 = vsel %vm604, %v601, %v430
      %v611 = vsel %vm604, %v602, %v432
      %v612 = vsel %vm604, %v603, %v434
      %vm613 = vcmask 326656
      %v614 = vsel %vm613, %v605, %v476
      %v615 = vsel %vm613, %v606, %v478
      %v616 = vsel %vm613, %v607, %v480
      %v617 = vsel %vm613, %v608, %v482
      %v618 = vsel %vm613, %v609, %v484
      %v619 = vsel %vm613, %v610, %v486
      %v620 = vsel %vm613, %v611, %v488
      %v621 = vsel %vm613, %v612, %v490
      %vm622 = vcmask 392192
      %v623 = vsel %vm622, %v614, %v501
      %v624 = vsel %vm622, %v615, %v503
      %v625 = vsel %vm622, %v616, %v505
      %v626 = vsel %vm622, %v617, %v507
      %v627 = vsel %vm622, %v618, %v509
      %v628 = vsel %vm622, %v619, %v511
      %v629 = vsel %vm622, %v620, %v513
      %v630 = vsel %vm622, %v621, %v515
      %vm631 = vcmask 457728
      %v632 = vsel %vm631, %v623, %v526
      %v633 = vsel %vm631, %v624, %v528
      %v634 = vsel %vm631, %v625, %v530
      %v635 = vsel %vm631, %v626, %v532
      %v636 = vsel %vm631, %v627, %v534
      %v637 = vsel %vm631, %v628, %v536
      %v638 = vsel %vm631, %v629, %v538
      %v639 = vsel %vm631, %v630, %v540
      %vm640 = vcmask 523264
      %v641 = vsel %vm640, %v632, %v554
      %v642 = vsel %vm640, %v633, %v556
      %v643 = vsel %vm640, %v634, %v558
      %v644 = vsel %vm640, %v635, %v560
      %v645 = vsel %vm640, %v636, %v562
      %v646 = vsel %vm640, %v637, %v564
      %v647 = vsel %vm640, %v638, %v566
      %v648 = vsel %vm640, %v639, %v568
      %v649 = vpack.c.bf16 %v642, %v641
      %v650 = vpack.c.bf16 %v644, %v643
      %v651 = vpack.c.bf16 %v646, %v645
      %v652 = vpack.c.bf16 %v648, %v647
      %v653 = vld [vmem:[%s1] sm:$0xf]
      %v654 = vld [vmem:[%s1 + $0x4] sm:$0xf]
      %v655 = vld [vmem:[%s1 + $0x8] sm:$0xf]
      %v656 = vld [vmem:[%s1 + $0xc] sm:$0xf]
      %v657 = vld [vmem:[%s1 + $0x10] sm:$0xf]
      %v658 = vld [vmem:[%s1 + $0x14] sm:$0xf]
      %v659 = vld [vmem:[%s1 + $0x18] sm:$0xf]
      %v660 = vld [vmem:[%s1 + $0x1c] sm:$0xf]
      %v661 = vld [vmem:[%s1 + $0x20] sm:$0xf]
      %v662 = vld [vmem:[%s2] sm:$0x1]
      %v664 = vlaneseq
      %v665 = vshrl.u32 %v664, 7
      %v666 = vsub.s32 0, %v665
      %v667 = vrot.slane %v662, %v666
      %v678 = vunpack.c.l.b16 %v653
      %v679 = vunpack.c.l.b16 %v654
      %v680 = vunpack.c.l.b16 %v655
      %v681 = vunpack.c.l.b16 %v656
      %v682 = vunpack.c.l.b16 %v657
      %v683 = vunpack.c.l.b16 %v658
      %v684 = vunpack.c.l.b16 %v659
      %v685 = vunpack.c.l.b16 %v660
      %v686 = vunpack.c.l.b16 %v661
      %v687 = vpack.c.b16 %v679, %v678
      %v688 = vpack.c.b16 %v681, %v680
      %v689 = vpack.c.b16 %v683, %v682
      %v690 = vpack.c.b16 %v685, %v684
      %v691 = vpack.c.b16 %v686, %v686
      %vm696 = vcmask 588800
      %v698 = vsel %vm696, %v649, 0
      %v701 = vsel %vm696, %v650, 0
      %v704 = vsel %vm696, %v651, 0
      %v707 = vsel %vm696, %v652, 0
      %vm709 = vcmask 1043456
      %v711 = vsel %vm709, %v691, 0
      %713 = vmatprep.subr.bf16.mxu0 0
      %714 = vmatpush1.bf16.msra.mxu0 0
      %715 = vmatprep.subr.bf16.mxu0 0
      %716 = vmatpush1.bf16.msra.mxu0 0
      %717 = vmatprep.subr.bf16.mxu0 0
      %718 = vmatpush1.bf16.msra.mxu0 0
      %719 = vmatprep.subr.bf16.mxu0 0
      %720 = vmatpush1.bf16.msra.mxu0 %v711
      %721 = vmatprep.subr.bf16.mxu0 0
      %722 = vmatpush1.bf16.msra.mxu0 %v690
      %723 = vmatprep.subr.bf16.mxu0 0
      %724 = vmatpush1.bf16.msra.mxu0 %v689
      %725 = vmatprep.subr.bf16.mxu0 0
      %726 = vmatpush1.bf16.msra.mxu0 %v688
      %727 = vmatprep.subr.bf16.mxu0 0
      %728 = vmatpush1.bf16.msra.mxu0 %v687
      %729 = vmatprep.subr.bf16.mxu0 0
      %730 = vmatpush2.bf16.msra.mxu0 0
      %731 = vmatprep.subr.bf16.mxu0 0
      %732 = vmatpush2.bf16.msra.mxu0 0
      %733 = vmatprep.subr.bf16.mxu0 0
      %734 = vmatpush2.bf16.msra.mxu0 0
      %735 = vmatprep.subr.bf16.mxu0 0
      %736 = vmatpush2.bf16.msra.mxu0 0
      %737 = vmatprep.subr.bf16.mxu0 0
      %738 = vmatpush2.bf16.msra.mxu0 0
      %739 = vmatprep.subr.bf16.mxu0 0
      %740 = vmatpush2.bf16.msra.mxu0 0
      %741 = vmatprep.subr.bf16.mxu0 0
      %742 = vmatpush2.bf16.msra.mxu0 0
      %743 = vmatprep.subr.bf16.mxu0 0
      %744 = vmatpush2.bf16.msra.mxu0 0
      %745 = vmatprep.mubr.bf16.mxu0 0
      %746 = vmatmul.mubr.bf16.gmra.mxu0 %v698
      %v747 = vpop.f32.mrf.mxu0
      %v748 = vadd.f32 %v667, %v747
      %v749 = vpop.f32.mrf.mxu0
      %v750 = vpop.f32.mrf.mxu0
      %v751 = vadd.f32 %v667, %v750
      %v752 = vpop.f32.mrf.mxu0
      %753 = vmatprep.mubr.bf16.mxu0 0
      %754 = vmatmul.mubr.bf16.gmra.mxu0 %v701
      %v755 = vpop.f32.mrf.mxu0
      %v756 = vadd.f32 %v667, %v755
      %v757 = vpop.f32.mrf.mxu0
      %v758 = vpop.f32.mrf.mxu0
      %v759 = vadd.f32 %v667, %v758
      %v760 = vpop.f32.mrf.mxu0
      %761 = vmatprep.mubr.bf16.mxu0 0
      %762 = vmatmul.mubr.bf16.gmra.mxu0 %v704
      %v763 = vpop.f32.mrf.mxu0
      %v764 = vadd.f32 %v667, %v763
      %v765 = vpop.f32.mrf.mxu0
      %v766 = vpop.f32.mrf.mxu0
      %v767 = vadd.f32 %v667, %v766
      %v768 = vpop.f32.mrf.mxu0
      %769 = vmatprep.mubr.bf16.mxu0 0
      %770 = vmatmul.mubr.bf16.gmra.mxu0 %v707
      %v771 = vpop.f32.mrf.mxu0
      %v772 = vadd.f32 %v667, %v771
      %v773 = vpop.f32.mrf.mxu0
      %v774 = vpop.f32.mrf.mxu0
      %v775 = vadd.f32 %v667, %v774
      %v776 = vpop.f32.mrf.mxu0
      %777 = vdwg.mxu0
      %v778 = vmax.f32 %v748, 0.0
      %v779 = vmax.f32 %v751, 0.0
      %v780 = vmax.f32 %v756, 0.0
      %v781 = vmax.f32 %v759, 0.0
      %v782 = vmax.f32 %v764, 0.0
      %v783 = vmax.f32 %v767, 0.0
      %v784 = vmax.f32 %v772, 0.0
      %v785 = vmax.f32 %v775, 0.0
      %v786 = vpack.c.bf16 %v779, %v778
      %v787 = vpack.c.bf16 %v781, %v780
      %v788 = vpack.c.bf16 %v783, %v782
      %v789 = vpack.c.bf16 %v785, %v784
      %v794 = vunpack.c.l.b16 %v786
      %v795 = vunpack.c.h.b16 %v786
      %v796 = vunpack.c.l.b16 %v787
      %v797 = vunpack.c.h.b16 %v787
      %v798 = vunpack.c.l.b16 %v788
      %v799 = vunpack.c.h.b16 %v788
      %v800 = vunpack.c.l.b16 %v789
      %v801 = vunpack.c.h.b16 %v789
      %v802 = vpack.c.b16 %v794, %v794
      %v803 = vpack.c.b16 %v795, %v795
      %v804 = vpack.c.b16 %v796, %v796
      %v805 = vpack.c.b16 %v797, %v797
      %v806 = vpack.c.b16 %v798, %v798
      %v807 = vpack.c.b16 %v799, %v799
      %v808 = vpack.c.b16 %v800, %v800
      %v809 = vpack.c.b16 %v801, %v801
      %vm818 = vcmask 125952
      %819 = vst.msk [vmem:[%s175] sm:$0xf] %vm818, %v802
      %820 = vst.msk [vmem:[%s175 + $0x4] sm:$0xf] %vm818, %v803
      %821 = vst.msk [vmem:[%s175 + $0x8] sm:$0xf] %vm818, %v804
      %822 = vst.msk [vmem:[%s175 + $0xc] sm:$0xf] %vm818, %v805
      %823 = vst.msk [vmem:[%s175 + $0x10] sm:$0xf] %vm818, %v806
      %824 = vst.msk [vmem:[%s175 + $0x14] sm:$0xf] %vm818, %v807
      %825 = vst.msk [vmem:[%s175 + $0x18] sm:$0xf] %vm818, %v808
      %826 = vst.msk [vmem:[%s175 + $0x1c] sm:$0xf] %vm818, %v809
      %p827 = scmp.lt.s32.totalorder %s14, 1
      %s828 = scalar_select %p827, %s14, 1
      %s829 = smul.addr %s828, 8
      %s830 = smul.addr %s829, 4
      %s831 = scalar_lea.vmem %s3, %s830
      // Predicated region
      $region33: #{tpu_custom_call.1} parent=31 // pred_check
        %p832 = pneg %p100
      $region34: #{tpu_custom_call.1} parent=31 // pred_check_branch
        %834 = sbr.rel (%p832) target = $region36
      $region35: #{tpu_custom_call.1} parent=31 // pred_region
        _
      $region36: #{tpu_custom_call.1} parent=31 // pred_fallthru
        _
    $region32: #{tpu_custom_call.1} parent=5 // pred_fallthru
      _
    %p835 = scmp.le.s32.totalorder 2, %s9
    // Predicated region
    $region37: #{tpu_custom_call.1} parent=5 // pred_check
      %p836 = pneg %p835
    $region38: #{tpu_custom_call.1} parent=5 // pred_check_branch
      %838 = sbr.rel (%p836) target = $region40
    $region39: #{tpu_custom_call.1} parent=5 // pred_region
      %s839 = ssub.s32 %s9, 2
      // Predicated region
      $region41: #{tpu_custom_call.1} parent=39 // pred_check
        %p840 = pneg %p106
      $region42: #{tpu_custom_call.1} parent=39 // pred_check_branch
        %842 = sbr.rel (%p840) target = $region44
      $region43: #{tpu_custom_call.1} parent=39 // pred_region
        %p843 = scmp.lt.s32.totalorder %s15, 1
        %s844 = scalar_select %p843, %s15, 1
        %s845 = smul.addr %s844, 8
        %s846 = smul.addr %s845, 4
        %s847 = scalar_lea.vmem %s3, %s846
      $region44: #{tpu_custom_call.1} parent=39 // pred_fallthru
        _
    $region40: #{tpu_custom_call.1} parent=5 // pred_fallthru
      _
  $region6: #{tpu_custom_call.1} parent=0 // loop_footer
    %s13 = sadd.s32 1, %s9
  $region7: #{tpu_custom_call.1} parent=0 // loop_footer_branch
    %8 = sbr.rel target = $region3
  $region8: #{tpu_custom_call.1} parent=0 // loop_exit
    _

</llo_original>
